<compile_context>
chip_gen: v7x
topology: tpu7x:2x2x1
jax: 0.10.0
libtpu: 0.0.40
codegen_flags: <defaults>
</compile_context>

<pallas_src>
import math
from functools import partial

import jax
import jax.numpy as jnp
from jax.experimental import pallas as pl
from jax.experimental.pallas import tpu as pltpu

_LOG_2PI = math.log(2.0 * math.pi)
_JNP_FALLBACK_ELEMS = 2048          # below this, dispatch overhead beats any kernel win
_DEFAULT_BLOCK_BYTES = 2 << 20      # ~2 MiB per streamed block (on the HBM roofline plateau)
_VMEM_LIMIT_CAP = 48 << 20          # stays under v7x's 64 MiB per-TC VMEM


def inverse_scale_transform(y):
    # inverse softplus: log(exp(y) - 1)
    return math.log(math.expm1(y))


def _softplus(v):
    # numerically stable softplus (== scale_transform)
    return jnp.maximum(v, 0.0) + jnp.log1p(jnp.exp(-jnp.abs(v)))


# ------------------------- elementwise math (shared) ------------------------
# The same functions are used inside the Pallas kernels and for the tiny-input
# jnp fallback, so both paths are numerically identical.

def _softplus_math(raw):
    return _softplus(raw)


def _log_prob_math(x, m, raw):
    s = _softplus(raw)
    z = (x - m) / s                      # exact division (approx reciprocal was not accurate enough)
    return -0.5 * (z * z) - jnp.log(s) - 0.5 * _LOG_2PI


def _sample_math(eps, m, raw):
    return m + _softplus(raw) * eps


# ------------------------------ Pallas kernels ------------------------------

def _softplus_kernel(raw_ref, o_ref):
    o_ref[...] = _softplus_math(raw_ref[...])


def _log_prob_kernel(x_ref, m_ref, raw_ref, o_ref):
    # m_ref / raw_ref may be resident (1,1) or (1,D) blocks; broadcasting happens
    # in-vreg so softplus/log run only on the small block.
    o_ref[...] = _log_prob_math(x_ref[...], m_ref[...], raw_ref[...])


def _sample_kernel(eps_ref, m_ref, raw_ref, o_ref):
    o_ref[...] = _sample_math(eps_ref[...], m_ref[...], raw_ref[...])


# --------------------------- hardware-aware helpers -------------------------

_HW = None


def _hw_info():
    """(per-core VMEM capacity bytes, #TensorCores) — conservative defaults if unknown."""
    global _HW
    if _HW is None:
        vmem = 64 << 20   # v7x per-TC value; smallest of the three generations
        n_tc = 1          # safe default: v5e/v6e are single-TC (grid = serial loop)
        try:
            info = pltpu.get_tpu_info()
            v = getattr(info, "vmem_capacity_bytes", None)
            if v:
                vmem = int(v)
            for attr in ("num_cores", "core_count", "num_tensorcores", "tensorcore_count"):
                c = getattr(info, attr, None)
                if c:
                    n_tc = int(c)
                    break
        except Exception:
            pass
        _HW = (vmem, n_tc)
    return _HW


def _round_up(x, m):
    return ((x + m - 1) // m) * m


# ------------------------- generic elementwise runner -----------------------

@partial(jax.jit, static_argnums=(0, 1, 2))
def _dispatch(kernel, math_fn, block_bytes, primary, *aux):
    """Run kernel(primary_ref, *aux_refs, out_ref) elementwise over `primary`.

    aux operands must broadcast to primary.shape.  Scalar / last-dim-row operands are
    passed as resident (1,1)/(1,D) blocks (index_map -> (0,0)); full-size operands are
    streamed.  No host-side pad/slice: non-dividing grids use Pallas partial blocks.
    Output has primary.shape, dtype float32.
    """
    primary = jnp.asarray(primary, jnp.float32)
    orig_shape = primary.shape
    aux = tuple(jnp.asarray(a, jnp.float32) for a in aux)

    # Tiny problems: a pallas_call launch dominates -> plain jnp (same math functions).
    if primary.size <= _JNP_FALLBACK_ELEMS:
        bargs = [jnp.broadcast_to(a, orig_shape) for a in aux]
        return math_fn(primary, *bargs)

    # Canonical 2-D view: (rows, D) for ndim>=2, (1, N) for vectors.
    if primary.ndim >= 2:
        D = primary.shape[-1]
        rows = primary.size // D
    else:
        D = primary.size
        rows = 1
    p2 = primary.reshape(rows, D)

    # Classify auxiliary operands: resident small block vs streamed full block.
    kinds, a2s = [], []
    for a in aux:
        if a.size == 1:
            kinds.append("res")
            a2s.append(a.reshape(1, 1))
        elif a.size == primary.size:
            kinds.append("full")
            a2s.append(a.reshape(rows, D))
        elif rows > 1 and a.size == D and (a.ndim <= 1 or a.shape[-1] == D):
            kinds.append("res")
            a2s.append(a.reshape(1, D))
        else:
            # rare fallback: materialize the broadcast (correctness first)
            kinds.append("full")
            a2s.append(jnp.broadcast_to(a, primary.shape).reshape(rows, D))

    vmem_cap, n_tc = _hw_info()
    n_streams = 2 + sum(1 for k in kinds if k == "full")   # primary + output + full aux

    if rows > 1:
        # Tile along rows: block second-to-last dim must be a multiple of 8
        # (or equal the full dim when a single block covers everything).
        tile = max(8, (block_bytes // (D * 4)) // 8 * 8)
        if n_tc > 1:
            want_blocks = 4 * n_tc          # >=4 blocks per core -> pipelined steady state
            tile = min(tile, max(8, _round_up(pl.cdiv(rows, want_blocks), 8)))
        if tile >= rows:
            tile = rows                      # single full block (any row count is legal)
        grid_n = pl.cdiv(rows, tile)
        block = (tile, D)
        stream_idx = lambda i: (i, 0)
    else:
        # Vector case: tile along the lane dimension (multiples of 128, or the full dim).
        tile = max(128, (block_bytes // 4) // 128 * 128)
        if n_tc > 1:
            want_blocks = 4 * n_tc
            tile = min(tile, max(128, _round_up(pl.cdiv(D, want_blocks), 128)))
        if tile >= D:
            tile = D
        grid_n = pl.cdiv(D, tile)
        block = (1, tile)
        stream_idx = lambda i: (0, i)

    stream_spec = pl.BlockSpec(block, stream_idx)
    in_specs = [stream_spec]
    for k, a2 in zip(kinds, a2s):
        if k == "full":
            in_specs.append(stream_spec)
        else:
            # resident small block: same block index every grid step -> no re-DMA
            in_specs.append(pl.BlockSpec(a2.shape, lambda i: (0, 0)))

    resident_bytes = sum(a2.size * 4 for k, a2 in zip(kinds, a2s) if k == "res")
    needed = 2 * n_streams * block[0] * block[1] * 4 + 2 * resident_bytes
    vmem_limit = int(min(max(2 * needed, 16 << 20), min(_VMEM_LIMIT_CAP, vmem_cap)))
    vmem_limit = max(vmem_limit, needed + (1 << 20))

    out = pl.pallas_call(
        kernel,
        out_shape=jax.ShapeDtypeStruct((rows, D), jnp.float32),
        grid_spec=pltpu.PrefetchScalarGridSpec(
            num_scalar_prefetch=0,
            grid=(grid_n,),
            in_specs=in_specs,
            out_specs=stream_spec,
        ),
        compiler_params=pltpu.CompilerParams(
            dimension_semantics=("parallel",),
            vmem_limit_bytes=vmem_limit,
        ),
    )(p2, *a2s)
    return out.reshape(orig_shape)


def _run_elementwise(kernel, math_fn, primary, aux=(), block_bytes=_DEFAULT_BLOCK_BYTES):
    return _dispatch(kernel, math_fn, int(block_bytes), primary, *aux)


# --------------------------------- module port ------------------------------

class LocScaleDist:
    """JAX/Pallas port of LocScaleDist with dist=Normal.

    forward() returns the Normal parameters {"loc", "scale"} (lazy broadcast), since
    torch.distributions.Normal has no Pallas-side equivalent object.
    """

    def __init__(self, dim, scale=None, constant_scale=False):
        if scale is None:
            if constant_scale:
                # nn.Parameter init: inverse_scale_transform(1.0) repeated dim times.
                self.s = jnp.full((dim,), inverse_scale_transform(1.0), jnp.float32)
                self.fix_s = True
                self.dim_input = dim
            else:
                self.s = None
                self.fix_s = False
                self.dim_input = dim * 2
        else:
            self.s = jnp.array([inverse_scale_transform(scale)], jnp.float32)
            self.fix_s = True
            self.dim_input = dim
        self.scale = None  # optional per-dim data rescale buffer (None in __init__)
        self._base_key = jax.random.PRNGKey(0)
        self._sample_count = 0  # so repeated eager sample() calls don't reuse the same key

    # -- helpers --
    def _raw(self, dim_idx, cond_scale):
        if self.fix_s:
            return self.s[dim_idx]
        return jnp.asarray(cond_scale, jnp.float32)

    # -- API matching the torch module --
    def get_sigma(self, dim_idx, cond_scale=None):
        # softplus runs only on the raw parameter (scalar / row / network output),
        # never on an O(B) broadcast.
        return _run_elementwise(_softplus_kernel, _softplus_math,
                                self._raw(dim_idx, cond_scale))

    def forward(self, cond, dim_idx, cond_scale=None):
        # TODO(synk): torch returns a Normal distribution object; we return its parameters.
        return {"loc": jnp.asarray(cond, jnp.float32),
                "scale": self.get_sigma(dim_idx, cond_scale)}

    __call__ = forward

    def log_prob(self, x, cond, dim_idx, cond_scale=None):
        x = jnp.asarray(x, jnp.float32)
        log_p = jnp.zeros((), jnp.float32)
        if self.scale is not None:
            scale = self.scale[..., dim_idx]
            x = x / scale
            log_p = log_p - jnp.log(scale)
        cond = jnp.asarray(cond, jnp.float32)
        raw = self._raw(dim_idx, cond_scale)
        target = jnp.broadcast_shapes(x.shape, cond.shape, jnp.shape(raw))
        if x.shape != target:
            x = jnp.broadcast_to(x, target)
        lp = _run_elementwise(_log_prob_kernel, _log_prob_math, x, (cond, raw))
        return log_p + lp

    def sample(self, dim_idx, sample_shape=(), cond=None, cond_scale=None, key=None):
        if key is None:
            # TODO(synk): this Python-side counter is not traced under jit/vmap/scan;
            # pass `key` explicitly in traced code.
            key = jax.random.fold_in(self._base_key, self._sample_count)
            self._sample_count += 1
        cond = jnp.asarray(cond, jnp.float32)
        raw = self._raw(dim_idx, cond_scale)
        batch_shape = jnp.broadcast_shapes(cond.shape, jnp.shape(raw))
        out_shape = tuple(sample_shape) + tuple(batch_shape)
        # TODO(synk): eps could be generated in-kernel (pltpu.prng_seed + prng_random_bits +
        # Box-Muller) to drop one HBM round-trip; kept host-side for interpreter portability.
        eps = jax.random.normal(key, out_shape, jnp.float32)
        x = _run_elementwise(_sample_kernel, _sample_math, eps, (cond, raw))
        if self.scale is not None:
            x = x * self.scale[..., dim_idx]
        return x


# ------------------------------------ demo ----------------------------------

if __name__ == "__main__":
    key = jax.random.PRNGKey(0)
    k1, k2, k3, k4, k5, k6, k7 = jax.random.split(key, 7)

    # ---- learned per-element scale (constant_scale=False, dim_input = 2*dim) ----
    B, D = 64, 128
    x = jax.random.normal(k1, (B, D), jnp.float32)
    cond = jax.random.normal(k2, (B, D), jnp.float32)
    cond_scale = jax.random.normal(k3, (B, D), jnp.float32)

    mod = LocScaleDist(dim=D, constant_scale=False)
    lp = jax.block_until_ready(mod.log_prob(x, cond, dim_idx=None, cond_scale=cond_scale))
    sig_ref = _softplus(cond_scale)
    ref = -0.5 * ((x - cond) / sig_ref) ** 2 - jnp.log(sig_ref) - 0.5 * _LOG_2PI
    assert jnp.allclose(lp, ref, atol=1e-4, rtol=1e-5), "log_prob mismatch (cond_scale path)"

    d = mod.forward(cond, dim_idx=None, cond_scale=cond_scale)
    jax.block_until_ready(d["scale"])
    assert jnp.allclose(d["scale"], sig_ref, atol=1e-5, rtol=1e-5), "get_sigma mismatch"
    assert jnp.allclose(d["loc"], cond)

    # ---- constant learned scale, single autoregressive dim (scalar raw, 1-D batch) ----
    mod_c = LocScaleDist(dim=D, constant_scale=True)
    dim_idx = 3
    Bc = 4096
    x_col = jax.random.normal(k4, (Bc,), jnp.float32)
    cond_col = jax.random.normal(k5, (Bc,), jnp.float32)
    lp_c = jax.block_until_ready(mod_c.log_prob(x_col, cond_col, dim_idx))
    sig_c = _softplus(jnp.float32(inverse_scale_transform(1.0)))   # == 1.0
    ref_c = -0.5 * ((x_col - cond_col) / sig_c) ** 2 - jnp.log(sig_c) - 0.5 * _LOG_2PI
    assert jnp.allclose(lp_c, ref_c, atol=1e-4, rtol=1e-5), "log_prob mismatch (fix_s scalar path)"

    # tiny-input path uses the jnp short-circuit (same math)
    lp_tiny = jax.block_until_ready(mod_c.log_prob(x_col[:8], cond_col[:8], dim_idx))
    assert jnp.allclose(lp_tiny, ref_c[:8], atol=1e-4, rtol=1e-5), "tiny-path mismatch"

    # ---- constant scale over all dims: resident (1,D) row raw, D<128 masked stores,
    #      plus a forced multi-block grid with a partial (non-dividing) last block ----
    Br, Dr = 300, 96
    mod_r = LocScaleDist(dim=Dr, constant_scale=True)
    xr = jax.random.normal(k6, (Br, Dr), jnp.float32)
    cr = jax.random.normal(k7, (Br, Dr), jnp.float32)
    idx = jnp.arange(Dr)
    raw_r = mod_r.s[idx]
    lp_r = jax.block_until_ready(
        _run_elementwise(_log_prob_kernel, _log_prob_math, xr, (cr, raw_r),
                         block_bytes=64 * 1024))   # small blocks -> multi-block + partial tail
    sig_r = _softplus(raw_r)
    ref_r = -0.5 * ((xr - cr) / sig_r) ** 2 - jnp.log(sig_r) - 0.5 * _LOG_2PI
    assert jnp.allclose(lp_r, ref_r, atol=1e-4, rtol=1e-5), "log_prob mismatch (row-scale, tiled)"
    # same inputs through the public API (default block target -> single block)
    lp_r2 = jax.block_until_ready(mod_r.log_prob(xr, cr, idx))
    assert jnp.allclose(lp_r2, ref_r, atol=1e-4, rtol=1e-5), "log_prob mismatch (row-scale path)"

    # ---- sample(): fused loc + sigma * eps kernel (resident row cond, scalar raw) ----
    smp = jax.block_until_ready(mod_c.sample(dim_idx, sample_shape=(2,), cond=cond_col))
    assert smp.shape == (2, Bc)
    assert bool(jnp.all(jnp.isfinite(smp)))
    k_s = jax.random.PRNGKey(42)
    s1 = jax.block_until_ready(mod_c.sample(dim_idx, sample_shape=(2,), cond=cond_col, key=k_s))
    eps_ref = jax.random.normal(k_s, (2, Bc), jnp.float32)
    ref_s = cond_col[None, :] + _softplus(mod_c.s[dim_idx]) * eps_ref
    assert jnp.allclose(s1, ref_s, atol=1e-4, rtol=1e-5), "sample mismatch"

    print("KERNEL_OK")
</pallas_src>

<mosaic_0001>
module attributes {stable_mosaic.version = 11 : i64} {
  func.func @_log_prob_kernel(%arg0: i32, %arg1: memref<64x128xf32, #tpu.memory_space<vmem>>, %arg2: memref<64x128xf32, #tpu.memory_space<vmem>>, %arg3: memref<64x128xf32, #tpu.memory_space<vmem>>, %arg4: memref<64x128xf32, #tpu.memory_space<vmem>>) attributes {dimension_semantics = [#tpu.dimension_semantics<parallel>], iteration_bounds = array<i64: 1>, scalar_prefetch = 0 : i64, scratch_operands = 0 : i64, tpu.core_type = #tpu.core_type<tc>, window_params = [{transform_indices = @transform_0, window_bounds = array<i64: 64, 128>}, {transform_indices = @transform_1, window_bounds = array<i64: 64, 128>}, {transform_indices = @transform_2, window_bounds = array<i64: 64, 128>}, {transform_indices = @transform_3, window_bounds = array<i64: 64, 128>}]} {
    %c0 = arith.constant 0 : index
    %c0_0 = arith.constant 0 : index
    %0 = vector.load %arg1[%c0, %c0_0] : memref<64x128xf32, #tpu.memory_space<vmem>>, vector<64x128xf32>
    %c0_1 = arith.constant 0 : index
    %c0_2 = arith.constant 0 : index
    %1 = vector.load %arg2[%c0_1, %c0_2] : memref<64x128xf32, #tpu.memory_space<vmem>>, vector<64x128xf32>
    %c0_3 = arith.constant 0 : index
    %c0_4 = arith.constant 0 : index
    %2 = vector.load %arg3[%c0_3, %c0_4] : memref<64x128xf32, #tpu.memory_space<vmem>>, vector<64x128xf32>
    %cst = arith.constant 0.000000e+00 : f32
    %3 = vector.broadcast %cst : f32 to vector<64x128xf32>
    %4 = arith.maximumf %2, %3 : vector<64x128xf32>
    %5 = math.absf %2 : vector<64x128xf32>
    %cst_5 = arith.constant 0.000000e+00 : f32
    %6 = vector.broadcast %cst_5 : f32 to vector<64x128xf32>
    %7 = arith.subf %6, %5 : vector<64x128xf32>
    %8 = math.exp %7 : vector<64x128xf32>
    %9 = math.log1p %8 : vector<64x128xf32>
    %10 = arith.addf %4, %9 : vector<64x128xf32>
    %11 = arith.subf %0, %1 : vector<64x128xf32>
    %12 = arith.divf %11, %10 : vector<64x128xf32>
    %13 = arith.mulf %12, %12 : vector<64x128xf32>
    %cst_6 = arith.constant -5.000000e-01 : f32
    %14 = vector.broadcast %cst_6 : f32 to vector<64x128xf32>
    %15 = arith.mulf %14, %13 : vector<64x128xf32>
    %16 = math.log %10 : vector<64x128xf32>
    %17 = arith.subf %15, %16 : vector<64x128xf32>
    %cst_7 = arith.constant 0.918938517 : f32
    %18 = vector.broadcast %cst_7 : f32 to vector<64x128xf32>
    %19 = arith.subf %17, %18 : vector<64x128xf32>
    %c0_8 = arith.constant 0 : index
    %c0_9 = arith.constant 0 : index
    %20 = vector.load %arg4[%c0_8, %c0_9] : memref<64x128xf32, #tpu.memory_space<vmem>>, vector<64x128xf32>
    tpu.vector_store %arg4[%c0_8, %c0_9], %19 {strides = array<i32>} : memref<64x128xf32, #tpu.memory_space<vmem>>, vector<64x128xf32>,
    return
  }
  func.func @transform_0(%arg0: i32) -> (i32, i32) {
    %c0_i32 = arith.constant 0 : i32
    %c0_i32_0 = arith.constant 0 : i32
    return %arg0, %c0_i32 : i32, i32
  }
  func.func @transform_1(%arg0: i32) -> (i32, i32) {
    %c0_i32 = arith.constant 0 : i32
    %c0_i32_0 = arith.constant 0 : i32
    return %arg0, %c0_i32 : i32, i32
  }
  func.func @transform_2(%arg0: i32) -> (i32, i32) {
    %c0_i32 = arith.constant 0 : i32
    %c0_i32_0 = arith.constant 0 : i32
    return %arg0, %c0_i32 : i32, i32
  }
  func.func @transform_3(%arg0: i32) -> (i32, i32) {
    %c0_i32 = arith.constant 0 : i32
    %c0_i32_0 = arith.constant 0 : i32
    return %arg0, %c0_i32 : i32, i32
  }
}

</mosaic_0001>

<llo_original>
// kernel: _dispatch.1
$region0: #{_dispatch.1}
  #allocation0 [shape = 'u32[]', space=smem, size = 0x4, offset = 0x4, fixed_abs, tag = 'smem constant byte address 0x4 - core index']
  #allocation1 [shape = 'u32[144,128]{1,0:T(1,128)}', space=vmem, size = 0x12000, scoped, tag = 'internal scratch']
  %s0 = inlined_call_operand.hbm [shape: f32[64,128], index: 0, kind: input, shape index: {}]
  %s1 = inlined_call_operand.hbm [shape: f32[64,128], index: 1, kind: input, shape index: {}]
  %s2 = inlined_call_operand.hbm [shape: f32[64,128], index: 2, kind: input, shape index: {}]
  %s3 = inlined_call_operand.hbm [shape: f32[64,128], index: 3, kind: output, shape index: {}]
  %s4 = sld [smem:[#allocation0]]
  $region34: #{_dispatch.1} parent=0
    _
  %s6 = ssub.s32 1, %s4
  %s7 = scalar_select 0, %s6, %s4
  $region1: #{_dispatch.1} parent=0
    #allocation2 [shape = 'u8[32768]{0}', space=vmem, size = 0x8000, scoped, tag = 'input window, operand 0, single buffered']
    #allocation3 [shape = 's32[1]{0}', space=sflag, size = 0x4, scoped, tag = 'scoped memory for _dispatch.1']
    #allocation4 [shape = 's32[1]{0}', space=sflag, size = 0x4, scoped, tag = 'scoped memory for _dispatch.1']
    #allocation5 [shape = 'u8[32768]{0}', space=vmem, size = 0x8000, scoped, tag = 'input window, operand 1, single buffered']
    #allocation6 [shape = 's32[1]{0}', space=sflag, size = 0x4, scoped, tag = 'scoped memory for _dispatch.1']
    #allocation7 [shape = 'u8[32768]{0}', space=vmem, size = 0x8000, scoped, tag = 'input window, operand 2, single buffered']
    #allocation8 [shape = 'u8[32768]{0}', space=vmem, size = 0x8000, scoped, tag = 'output window, operand 0, single buffered']
    %8 = vsyncpa [#allocation3], 0
    %9 = vsyncpa [#allocation6], 0
    %10 = vsyncpa [#allocation4], 0
    // Predicated region
    $region2: #{_dispatch.1} parent=1 // pred_check
      _
    $region3: #{_dispatch.1} parent=1 // pred_check_branch
      %12 = sbr.rel (0) target = $region5
    $region4: #{_dispatch.1} parent=1 // pred_region
      %s14 = ssub.s32 1024, 1024
      %15 = vsyncadd [#allocation3], %s14
      %s16 = sshll.u32 [#allocation2], 4
      %s17 = int_to_ptr.vmem [resolvable:$true] %s16
      %22 = dma.hbm_to_vmem [thread:$0]  %s0, 1024, %s17, [#allocation3], 128, 128, 8
    $region5: #{_dispatch.1} parent=1 // pred_fallthru
      _
    // Predicated region
    $region6: #{_dispatch.1} parent=1 // pred_check
      _
    $region7: #{_dispatch.1} parent=1 // pred_check_branch
      %24 = sbr.rel (0) target = $region9
    $region8: #{_dispatch.1} parent=1 // pred_region
      %s26 = ssub.s32 1024, 1024
      %27 = vsyncadd [#allocation6], %s26
      %s28 = sshll.u32 [#allocation5], 4
      %s29 = int_to_ptr.vmem [resolvable:$true] %s28
      %34 = dma.hbm_to_vmem [thread:$0]  %s1, 1024, %s29, [#allocation6], 128, 128, 8
    $region9: #{_dispatch.1} parent=1 // pred_fallthru
      _
    // Predicated region
    $region10: #{_dispatch.1} parent=1 // pred_check
      _
    $region11: #{_dispatch.1} parent=1 // pred_check_branch
      %36 = sbr.rel (0) target = $region13
    $region12: #{_dispatch.1} parent=1 // pred_region
      %s38 = ssub.s32 1024, 1024
      %39 = vsyncadd [#allocation6], %s38
      %s40 = sshll.u32 [#allocation7], 4
      %s41 = int_to_ptr.vmem [resolvable:$true] %s40
      %46 = dma.hbm_to_vmem [thread:$0]  %s2, 1024, %s41, [#allocation6], 128, 128, 8
    $region13: #{_dispatch.1} parent=1 // pred_fallthru
      _
    // Predicated region
    $region14: #{_dispatch.1} parent=1 // pred_check
      _
    $region15: #{_dispatch.1} parent=1 // pred_check_branch
      %48 = sbr.rel (0) target = $region17
    $region16: #{_dispatch.1} parent=1 // pred_region
      %49 = dma.done [#allocation3], 1024
    $region17: #{_dispatch.1} parent=1 // pred_fallthru
      _
    // Predicated region
    $region18: #{_dispatch.1} parent=1 // pred_check
      _
    $region19: #{_dispatch.1} parent=1 // pred_check_branch
      %51 = sbr.rel (0) target = $region21
    $region20: #{_dispatch.1} parent=1 // pred_region
      %52 = dma.done [#allocation6], 1024
    $region21: #{_dispatch.1} parent=1 // pred_fallthru
      _
    // Predicated region
    $region22: #{_dispatch.1} parent=1 // pred_check
      _
    $region23: #{_dispatch.1} parent=1 // pred_check_branch
      %54 = sbr.rel (0) target = $region25
    $region24: #{_dispatch.1} parent=1 // pred_region
      %55 = dma.done [#allocation6], 1024
    $region25: #{_dispatch.1} parent=1 // pred_fallthru
      _
    %v56 = vld [vmem:[#allocation2] sm:$0xff]
    %v57 = vld [vmem:[#allocation2 + $0x8] sm:$0xff]
    %v58 = vld [vmem:[#allocation2 + $0x10] sm:$0xff]
    %v59 = vld [vmem:[#allocation2 + $0x18] sm:$0xff]
    %v60 = vld [vmem:[#allocation2 + $0x20] sm:$0xff]
    %v61 = vld [vmem:[#allocation2 + $0x28] sm:$0xff]
    %v62 = vld [vmem:[#allocation2 + $0x30] sm:$0xff]
    %v63 = vld [vmem:[#allocation2 + $0x38] sm:$0xff]
    %v64 = vld [vmem:[#allocation5] sm:$0xff]
    %v65 = vld [vmem:[#allocation5 + $0x8] sm:$0xff]
    %v66 = vld [vmem:[#allocation5 + $0x10] sm:$0xff]
    %v67 = vld [vmem:[#allocation5 + $0x18] sm:$0xff]
    %v68 = vld [vmem:[#allocation5 + $0x20] sm:$0xff]
    %v69 = vld [vmem:[#allocation5 + $0x28] sm:$0xff]
    %v70 = vld [vmem:[#allocation5 + $0x30] sm:$0xff]
    %v71 = vld [vmem:[#allocation5 + $0x38] sm:$0xff]
    %v72 = vld [vmem:[#allocation7] sm:$0xff]
    %v73 = vld [vmem:[#allocation7 + $0x8] sm:$0xff]
    %v74 = vld [vmem:[#allocation7 + $0x10] sm:$0xff]
    %v75 = vld [vmem:[#allocation7 + $0x18] sm:$0xff]
    %v76 = vld [vmem:[#allocation7 + $0x20] sm:$0xff]
    %v77 = vld [vmem:[#allocation7 + $0x28] sm:$0xff]
    %v78 = vld [vmem:[#allocation7 + $0x30] sm:$0xff]
    %v79 = vld [vmem:[#allocation7 + $0x38] sm:$0xff]
    %v80 = vmax.f32 %v72, 0.0
    %v81 = vmax.f32 %v73, 0.0
    %v82 = vmax.f32 %v74, 0.0
    %v83 = vmax.f32 %v75, 0.0
    %v84 = vmax.f32 %v76, 0.0
    %v85 = vmax.f32 %v77, 0.0
    %v86 = vmax.f32 %v78, 0.0
    %v87 = vmax.f32 %v79, 0.0
    %v88 = vand.u32 2147483647, %v72
    %v89 = vand.u32 2147483647, %v73
    %v90 = vand.u32 2147483647, %v74
    %v91 = vand.u32 2147483647, %v75
    %v92 = vand.u32 2147483647, %v76
    %v93 = vand.u32 2147483647, %v77
    %v94 = vand.u32 2147483647, %v78
    %v95 = vand.u32 2147483647, %v79
    %v96 = vsub.f32 0.0, %v88
    %v97 = vsub.f32 0.0, %v89
    %v98 = vsub.f32 0.0, %v90
    %v99 = vsub.f32 0.0, %v91
    %v100 = vsub.f32 0.0, %v92
    %v101 = vsub.f32 0.0, %v93
    %v102 = vsub.f32 0.0, %v94
    %v103 = vsub.f32 0.0, %v95
    %v104 = vmul.f32 %v96, 1.442695
    %v105 = vpow.pop %v104
    %v106 = vmul.f32 %v97, 1.442695
    %v107 = vpow.pop %v106
    %v108 = vmul.f32 %v98, 1.442695
    %v109 = vpow.pop %v108
    %v110 = vmul.f32 %v99, 1.442695
    %v111 = vpow.pop %v110
    %v112 = vmul.f32 %v100, 1.442695
    %v113 = vpow.pop %v112
    %v114 = vmul.f32 %v101, 1.442695
    %v115 = vpow.pop %v114
    %v116 = vmul.f32 %v102, 1.442695
    %v117 = vpow.pop %v116
    %v118 = vmul.f32 %v103, 1.442695
    %v119 = vpow.pop %v118
    %v120 = vadd.f32 %v105, 1.0
    %v121 = vlog2.pop %v120
    %v122 = vmul.f32 %v121, 0.6931472
    %v123 = vmul.f32 -0.5, %v105
    %v124 = vadd.f32 %v123, 1.0
    %v125 = vmul.f32 %v124, %v105
    %v126 = vand.u32 2147483647, %v105
    %vm127 = vcmp.lt.f32.partialorder %v126, 0.0004427343
    %v128 = vsel %vm127, %v125, %v122
    %v129 = vadd.f32 %v107, 1.0
    %v130 = vlog2.pop %v129
    %v131 = vmul.f32 %v130, 0.6931472
    %v132 = vmul.f32 -0.5, %v107
    %v133 = vadd.f32 %v132, 1.0
    %v134 = vmul.f32 %v133, %v107
    %v135 = vand.u32 2147483647, %v107
    %vm136 = vcmp.lt.f32.partialorder %v135, 0.0004427343
    %v137 = vsel %vm136, %v134, %v131
    %v138 = vadd.f32 %v109, 1.0
    %v139 = vlog2.pop %v138
    %v140 = vmul.f32 %v139, 0.6931472
    %v141 = vmul.f32 -0.5, %v109
    %v142 = vadd.f32 %v141, 1.0
    %v143 = vmul.f32 %v142, %v109
    %v144 = vand.u32 2147483647, %v109
    %vm145 = vcmp.lt.f32.partialorder %v144, 0.0004427343
    %v146 = vsel %vm145, %v143, %v140
    %v147 = vadd.f32 %v111, 1.0
    %v148 = vlog2.pop %v147
    %v149 = vmul.f32 %v148, 0.6931472
    %v150 = vmul.f32 -0.5, %v111
    %v151 = vadd.f32 %v150, 1.0
    %v152 = vmul.f32 %v151, %v111
    %v153 = vand.u32 2147483647, %v111
    %vm154 = vcmp.lt.f32.partialorder %v153, 0.0004427343
    %v155 = vsel %vm154, %v152, %v149
    %v156 = vadd.f32 %v113, 1.0
    %v157 = vlog2.pop %v156
    %v158 = vmul.f32 %v157, 0.6931472
    %v159 = vmul.f32 -0.5, %v113
    %v160 = vadd.f32 %v159, 1.0
    %v161 = vmul.f32 %v160, %v113
    %v162 = vand.u32 2147483647, %v113
    %vm163 = vcmp.lt.f32.partialorder %v162, 0.0004427343
    %v164 = vsel %vm163, %v161, %v158
    %v165 = vadd.f32 %v115, 1.0
    %v166 = vlog2.pop %v165
    %v167 = vmul.f32 %v166, 0.6931472
    %v168 = vmul.f32 -0.5, %v115
    %v169 = vadd.f32 %v168, 1.0
    %v170 = vmul.f32 %v169, %v115
    %v171 = vand.u32 2147483647, %v115
    %vm172 = vcmp.lt.f32.partialorder %v171, 0.0004427343
    %v173 = vsel %vm172, %v170, %v167
    %v174 = vadd.f32 %v117, 1.0
    %v175 = vlog2.pop %v174
    %v176 = vmul.f32 %v175, 0.6931472
    %v177 = vmul.f32 -0.5, %v117
    %v178 = vadd.f32 %v177, 1.0
    %v179 = vmul.f32 %v178, %v117
    %v180 = vand.u32 2147483647, %v117
    %vm181 = vcmp.lt.f32.partialorder %v180, 0.0004427343
    %v182 = vsel %vm181, %v179, %v176
    %v183 = vadd.f32 %v119, 1.0
    %v184 = vlog2.pop %v183
    %v185 = vmul.f32 %v184, 0.6931472
    %v186 = vmul.f32 -0.5, %v119
    %v187 = vadd.f32 %v186, 1.0
    %v188 = vmul.f32 %v187, %v119
    %v189 = vand.u32 2147483647, %v119
    %vm190 = vcmp.lt.f32.partialorder %v189, 0.0004427343
    %v191 = vsel %vm190, %v188, %v185
    %v192 = vadd.f32 %v80, %v128
    %v193 = vadd.f32 %v81, %v137
    %v194 = vadd.f32 %v82, %v146
    %v195 = vadd.f32 %v83, %v155
    %v196 = vadd.f32 %v84, %v164
    %v197 = vadd.f32 %v85, %v173
    %v198 = vadd.f32 %v86, %v182
    %v199 = vadd.f32 %v87, %v191
    %v200 = vsub.f32 %v56, %v64
    %v201 = vsub.f32 %v57, %v65
    %v202 = vsub.f32 %v58, %v66
    %v203 = vsub.f32 %v59, %v67
    %v204 = vsub.f32 %v60, %v68
    %v205 = vsub.f32 %v61, %v69
    %v206 = vsub.f32 %v62, %v70
    %v207 = vsub.f32 %v63, %v71
    %v208 = vrcp.pop %v192
    %v209 = vmul.f32 %v200, %v208
    %v210 = vrcp.pop %v193
    %v211 = vmul.f32 %v201, %v210
    %v212 = vrcp.pop %v194
    %v213 = vmul.f32 %v202, %v212
    %v214 = vrcp.pop %v195
    %v215 = vmul.f32 %v203, %v214
    %v216 = vrcp.pop %v196
    %v217 = vmul.f32 %v204, %v216
    %v218 = vrcp.pop %v197
    %v219 = vmul.f32 %v205, %v218
    %v220 = vrcp.pop %v198
    %v221 = vmul.f32 %v206, %v220
    %v222 = vrcp.pop %v199
    %v223 = vmul.f32 %v207, %v222
    %v224 = vmul.f32 %v209, %v209
    %v225 = vmul.f32 %v211, %v211
    %v226 = vmul.f32 %v213, %v213
    %v227 = vmul.f32 %v215, %v215
    %v228 = vmul.f32 %v217, %v217
    %v229 = vmul.f32 %v219, %v219
    %v230 = vmul.f32 %v221, %v221
    %v231 = vmul.f32 %v223, %v223
    %v232 = vmul.f32 %v224, -0.5
    %v233 = vmul.f32 %v225, -0.5
    %v234 = vmul.f32 %v226, -0.5
    %v235 = vmul.f32 %v227, -0.5
    %v236 = vmul.f32 %v228, -0.5
    %v237 = vmul.f32 %v229, -0.5
    %v238 = vmul.f32 %v230, -0.5
    %v239 = vmul.f32 %v231, -0.5
    %v240 = vlog2.pop %v192
    %v241 = vmul.f32 %v240, 0.6931472
    %v242 = vlog2.pop %v193
    %v243 = vmul.f32 %v242, 0.6931472
    %v244 = vlog2.pop %v194
    %v245 = vmul.f32 %v244, 0.6931472
    %v246 = vlog2.pop %v195
    %v247 = vmul.f32 %v246, 0.6931472
    %v248 = vlog2.pop %v196
    %v249 = vmul.f32 %v248, 0.6931472
    %v250 = vlog2.pop %v197
    %v251 = vmul.f32 %v250, 0.6931472
    %v252 = vlog2.pop %v198
    %v253 = vmul.f32 %v252, 0.6931472
    %v254 = vlog2.pop %v199
    %v255 = vmul.f32 %v254, 0.6931472
    %v256 = vsub.f32 %v232, %v241
    %v257 = vsub.f32 %v233, %v243
    %v258 = vsub.f32 %v234, %v245
    %v259 = vsub.f32 %v235, %v247
    %v260 = vsub.f32 %v236, %v249
    %v261 = vsub.f32 %v237, %v251
    %v262 = vsub.f32 %v238, %v253
    %v263 = vsub.f32 %v239, %v255
    %v264 = vsub.f32 %v256, 0.9189385
    %v265 = vsub.f32 %v257, 0.9189385
    %v266 = vsub.f32 %v258, 0.9189385
    %v267 = vsub.f32 %v259, 0.9189385
    %v268 = vsub.f32 %v260, 0.9189385
    %v269 = vsub.f32 %v261, 0.9189385
    %v270 = vsub.f32 %v262, 0.9189385
    %v271 = vsub.f32 %v263, 0.9189385
    %272 = vst [vmem:[#allocation8] sm:$0xff] %v264
    %273 = vst [vmem:[#allocation8 + $0x8] sm:$0xff] %v265
    %274 = vst [vmem:[#allocation8 + $0x10] sm:$0xff] %v266
    %275 = vst [vmem:[#allocation8 + $0x18] sm:$0xff] %v267
    %276 = vst [vmem:[#allocation8 + $0x20] sm:$0xff] %v268
    %277 = vst [vmem:[#allocation8 + $0x28] sm:$0xff] %v269
    %278 = vst [vmem:[#allocation8 + $0x30] sm:$0xff] %v270
    %279 = vst [vmem:[#allocation8 + $0x38] sm:$0xff] %v271
    // Predicated region
    $region26: #{_dispatch.1} parent=1 // pred_check
      _
    $region27: #{_dispatch.1} parent=1 // pred_check_branch
      %281 = sbr.rel (0) target = $region29
    $region28: #{_dispatch.1} parent=1 // pred_region
      %s283 = ssub.s32 1024, 1024
      %284 = vsyncadd [#allocation4], %s283
      %s285 = sshll.u32 [#allocation8], 4
      %s286 = int_to_ptr.vmem [resolvable:$true] %s285
      %291 = dma.vmem_to_hbm [thread:$0]  %s286, 1024, %s3, [#allocation4], 128, 128, 8
    $region29: #{_dispatch.1} parent=1 // pred_fallthru
      _
    // Predicated region
    $region30: #{_dispatch.1} parent=1 // pred_check
      _
    $region31: #{_dispatch.1} parent=1 // pred_check_branch
      %293 = sbr.rel (0) target = $region33
    $region32: #{_dispatch.1} parent=1 // pred_region
      %294 = dma.done [#allocation4], 1024
    $region33: #{_dispatch.1} parent=1 // pred_fallthru
      _
    %295 = vsyncpa [#allocation3], 1
    %296 = vsyncpa [#allocation6], 1
    %297 = vsyncpa [#allocation4], 1

</llo_original>
